<compile_context>
chip_gen: v7x
topology: tpu7x:2x2x1
jax: 0.10.0
libtpu: 0.0.40
codegen_flags: <defaults>
</compile_context>

<pallas_src>
import functools

import jax
import jax.numpy as jnp
from jax.experimental import pallas as pl
from jax.experimental.pallas import tpu as pltpu

_H1 = 256
_H2 = 512
_LANE = 128
_SUBLANE_BF16 = 16          # bf16 packs 16 sublanes per vreg
_TILE_N_TARGET = 8192       # ~8 MiB bf16 w3 tile per grid step


def _round_up(v, m):
    return (v + m - 1) // m * m


def _pick_tile_n(out_dim_pad):
    """Largest 128-multiple tile that divides out_dim_pad exactly (so no
    zero-padded w3 columns are streamed), is <= _TILE_N_TARGET, and leaves
    >= 2 tiles whenever possible (so the v7x megacore splits fc3)."""
    n128 = out_dim_pad // _LANE
    best = 1
    for t in range(1, n128 + 1):
        if t * _LANE > _TILE_N_TARGET:
            break
        if n128 % t:
            continue
        if n128 >= 2 and t == n128:   # prefer keeping at least 2 tiles
            continue
        best = t
    return best * _LANE


def _mlp_mask_kernel(x_ref, w1_ref, b1_ref, w2_ref, b2_ref, w3_ref, b3_ref,
                     o_ref, *, inv_temperature):
    # fc1: Linear(latent -> 256) + ReLU   (bf16 MXU inputs, f32 accumulate)
    x = x_ref[...]
    h1 = jnp.dot(x, w1_ref[...], preferred_element_type=jnp.float32) + b1_ref[...]
    h1 = jnp.maximum(h1, 0.0)

    # fc2: Linear(256 -> 512) + ReLU
    h2 = jnp.dot(h1.astype(jnp.bfloat16), w2_ref[...],
                 preferred_element_type=jnp.float32) + b2_ref[...]
    h2 = jnp.maximum(h2, 0.0)

    # fc3: Linear(512 -> out_dim tile), then sigmoid(h / temperature).
    # fc1/fc2 above are recomputed per out_dim tile (cheap) so each grid step
    # is fully independent -> safe under "parallel" megacore sharding on v7x.
    h3 = jnp.dot(h2.astype(jnp.bfloat16), w3_ref[...],
                 preferred_element_type=jnp.float32) + b3_ref[...]
    o_ref[...] = jax.nn.sigmoid(h3 * inv_temperature).astype(o_ref.dtype)


def prepare_params(params, image_size):
    """One-time layout prep: cast weights to bf16 / biases to f32 and pad the
    fc3 output dimension up to a 128-lane multiple.  Call this ONCE (outside
    the per-step jit); the forward then consumes the prepared arrays directly,
    so the dominant w3 stream is never re-cast or re-padded per call."""
    out_dim = image_size * image_size
    pad_n = _round_up(out_dim, _LANE) - out_dim
    return dict(
        w1=params["w1"].astype(jnp.bfloat16),
        b1=params["b1"].astype(jnp.float32),
        w2=params["w2"].astype(jnp.bfloat16),
        b2=params["b2"].astype(jnp.float32),
        w3=jnp.pad(params["w3"], ((0, 0), (0, pad_n))).astype(jnp.bfloat16),
        b3=jnp.pad(params["b3"], ((0, 0), (0, pad_n))).astype(jnp.float32),
    )


def fc_mask_generator_forward(x, prepared, *, temperature, image_size, batch_size):
    """Pallas implementation of fcMaskGenerator.forward.

    x: any shape with leading batch dim; flattened to (batch_size, -1) like
       PyTorch's input.view(batch_size, -1).
    prepared: output of prepare_params (pre-cast / pre-padded weights).
    Returns (batch_size, 1, image_size, image_size) float32.
    """
    out_dim = image_size * image_size
    out_dim_pad = _round_up(out_dim, _LANE)
    tile_n = _pick_tile_n(out_dim_pad)
    n_tiles = out_dim_pad // tile_n

    # --- wrapper-side activation prep (tiny) --------------------------------
    x2d = x.reshape(batch_size, -1)
    latent = x2d.shape[1]
    b_pad = _round_up(batch_size, _SUBLANE_BF16)   # full bf16 vreg sublane pack
    x2d = jnp.pad(x2d, ((0, b_pad - batch_size), (0, 0))).astype(jnp.bfloat16)

    w1, b1 = prepared["w1"], prepared["b1"]
    w2, b2 = prepared["w2"], prepared["b2"]
    w3, b3 = prepared["w3"], prepared["b3"]

    kernel = functools.partial(_mlp_mask_kernel,
                               inv_temperature=float(1.0 / temperature))

    # Cost hint so XLA can schedule/overlap this small custom call.
    flops = 2 * b_pad * (latent * _H1 + _H1 * _H2 + _H2 * out_dim_pad)
    bytes_accessed = (x2d.size * 2 + w1.size * 2 + w2.size * 2 + w3.size * 2
                      + b1.size * 4 + b2.size * 4 + b3.size * 4
                      + b_pad * out_dim_pad * 4)
    cost = pl.CostEstimate(flops=flops,
                           transcendentals=b_pad * out_dim_pad,
                           bytes_accessed=bytes_accessed)

    # VMEM sized from the actual double-buffered footprint (+4 MiB headroom),
    # clamped to [16 MiB, 32 MiB] -- well under v7x's 64 MiB physical VMEM.
    fixed_bytes = (x2d.size * 2 + w1.size * 2 + b1.size * 4
                   + w2.size * 2 + b2.size * 4)
    tile_bytes = _H2 * tile_n * 2 + tile_n * 4 + b_pad * tile_n * 4
    vmem_needed = 2 * (fixed_bytes + tile_bytes)
    vmem_limit = int(min(32 << 20, max(16 << 20, vmem_needed + (4 << 20))))

    # Operands that do not vary with the out_dim tile index are single full
    # blocks; w3/b3/out are tiled along the last (lane) dim.
    fixed = lambda shape: pl.BlockSpec(shape, lambda j: (0, 0))

    out = pl.pallas_call(
        kernel,
        out_shape=jax.ShapeDtypeStruct((b_pad, out_dim_pad), jnp.float32),
        grid=(n_tiles,),
        in_specs=[
            fixed((b_pad, latent)),
            fixed((latent, _H1)), fixed((1, _H1)),
            fixed((_H1, _H2)), fixed((1, _H2)),
            pl.BlockSpec((_H2, tile_n), lambda j: (0, j)),
            pl.BlockSpec((1, tile_n), lambda j: (0, j)),
        ],
        out_specs=pl.BlockSpec((b_pad, tile_n), lambda j: (0, j)),
        compiler_params=pltpu.CompilerParams(
            dimension_semantics=("parallel",),
            vmem_limit_bytes=vmem_limit,
        ),
        cost_estimate=cost,
    )(x2d, w1, b1, w2, b2, w3, b3)

    # Strip padding and reshape to NCHW like the PyTorch module.
    out = out[:batch_size, :out_dim]
    return out.reshape(batch_size, 1, image_size, image_size)


def init_params(key, latent_size, image_size):
    """Deterministic synthetic parameters with the shapes implied by __init__."""
    ks = jax.random.split(key, 6)
    out_dim = image_size * image_size

    def lin(kw, kb, fan_in, fan_out):
        # PyTorch nn.Linear-style uniform(-1/sqrt(fan_in), 1/sqrt(fan_in)).
        bound = 1.0 / jnp.sqrt(jnp.float32(fan_in))
        w = jax.random.uniform(kw, (fan_in, fan_out), jnp.float32, -bound, bound)
        b = jax.random.uniform(kb, (1, fan_out), jnp.float32, -bound, bound)
        return w, b

    w1, b1 = lin(ks[0], ks[1], latent_size, _H1)
    w2, b2 = lin(ks[2], ks[3], _H1, _H2)
    w3, b3 = lin(ks[4], ks[5], _H2, out_dim)
    return dict(w1=w1, b1=b1, w2=w2, b2=b2, w3=w3, b3=b3)


if __name__ == "__main__":
    batch_size = 2
    latent_size = 32
    image_size = 16
    temperature = 0.5

    key = jax.random.PRNGKey(0)
    k_x, k_p = jax.random.split(key)
    x = jax.random.normal(k_x, (batch_size, latent_size), jnp.float32)
    params = init_params(k_p, latent_size, image_size)

    # One-time weight prep (cast/pad) -- done OUTSIDE the per-step jit so the
    # dominant w3 stream is not re-processed on every forward call.
    prepared = jax.block_until_ready(prepare_params(params, image_size))

    fwd = jax.jit(functools.partial(
        fc_mask_generator_forward,
        temperature=temperature,
        image_size=image_size,
        batch_size=batch_size,
    ))
    out = jax.block_until_ready(fwd(x, prepared))

    assert out.shape == (batch_size, 1, image_size, image_size), out.shape
    assert out.dtype == jnp.float32
    # sigmoid output range sanity check
    assert bool(jnp.all((out >= 0.0) & (out <= 1.0)))

    # bf16-MXU vs f32 reference sanity check (loose tolerance, bf16 dots).
    x32 = x.reshape(batch_size, -1)
    h1 = jnp.maximum(x32 @ params["w1"] + params["b1"], 0.0)
    h2 = jnp.maximum(h1 @ params["w2"] + params["b2"], 0.0)
    ref = jax.nn.sigmoid((h2 @ params["w3"] + params["b3"]) / temperature)
    ref = ref.reshape(batch_size, 1, image_size, image_size)
    assert bool(jnp.max(jnp.abs(out - ref)) < 5e-2)

    print("KERNEL_OK")
</pallas_src>

<mosaic_0001>
module attributes {stable_mosaic.version = 11 : i64} {
  func.func @_mlp_mask_kernel(%arg0: i32, %arg1: memref<16x32xbf16, #tpu.memory_space<vmem>>, %arg2: memref<32x256xbf16, #tpu.memory_space<vmem>>, %arg3: memref<1x256xf32, #tpu.memory_space<vmem>>, %arg4: memref<256x512xbf16, #tpu.memory_space<vmem>>, %arg5: memref<1x512xf32, #tpu.memory_space<vmem>>, %arg6: memref<512x128xbf16, #tpu.memory_space<vmem>>, %arg7: memref<1x128xf32, #tpu.memory_space<vmem>>, %arg8: memref<16x128xf32, #tpu.memory_space<vmem>>) attributes {dimension_semantics = [#tpu.dimension_semantics<parallel>], iteration_bounds = array<i64: 2>, scalar_prefetch = 0 : i64, scratch_operands = 0 : i64, tpu.core_type = #tpu.core_type<tc>, window_params = [{pipeline_mode = #tpu.pipeline_mode<synchronous>, transform_indices = @transform_0, window_bounds = array<i64: 16, 32>}, {pipeline_mode = #tpu.pipeline_mode<synchronous>, transform_indices = @transform_1, window_bounds = array<i64: 32, 256>}, {pipeline_mode = #tpu.pipeline_mode<synchronous>, transform_indices = @transform_2, window_bounds = array<i64: 1, 256>}, {pipeline_mode = #tpu.pipeline_mode<synchronous>, transform_indices = @transform_3, window_bounds = array<i64: 256, 512>}, {pipeline_mode = #tpu.pipeline_mode<synchronous>, transform_indices = @transform_4, window_bounds = array<i64: 1, 512>}, {transform_indices = @transform_5, window_bounds = array<i64: 512, 128>}, {transform_indices = @transform_6, window_bounds = array<i64: 1, 128>}, {transform_indices = @transform_7, window_bounds = array<i64: 16, 128>}]} {
    %c0 = arith.constant 0 : index
    %c0_0 = arith.constant 0 : index
    %0 = vector.load %arg1[%c0, %c0_0] : memref<16x32xbf16, #tpu.memory_space<vmem>>, vector<16x32xbf16>
    %c0_1 = arith.constant 0 : index
    %c0_2 = arith.constant 0 : index
    %1 = vector.load %arg2[%c0_1, %c0_2] : memref<32x256xbf16, #tpu.memory_space<vmem>>, vector<32x256xbf16>
    %cst = arith.constant dense<0.000000e+00> : vector<16x256xf32>
    %2 = tpu.matmul %0, %1, %cst {dimension_numbers = #tpu.dot_dimension_numbers<[1], [0], [0], [1], [0, 0, 1, 1], [], []>} : vector<16x32xbf16>, vector<32x256xbf16>, vector<16x256xf32> -> vector<16x256xf32>
    %c0_3 = arith.constant 0 : index
    %c0_4 = arith.constant 0 : index
    %3 = vector.load %arg3[%c0_3, %c0_4] : memref<1x256xf32, #tpu.memory_space<vmem>>, vector<1x256xf32>
    %4 = vector.broadcast %3 : vector<1x256xf32> to vector<16x256xf32>
    %5 = arith.addf %2, %4 : vector<16x256xf32>
    %cst_5 = arith.constant 0.000000e+00 : f32
    %6 = vector.broadcast %cst_5 : f32 to vector<16x256xf32>
    %7 = arith.maximumf %5, %6 : vector<16x256xf32>
    %8 = arith.truncf %7 : vector<16x256xf32> to vector<16x256xbf16>
    %c0_6 = arith.constant 0 : index
    %c0_7 = arith.constant 0 : index
    %9 = vector.load %arg4[%c0_6, %c0_7] : memref<256x512xbf16, #tpu.memory_space<vmem>>, vector<256x512xbf16>
    %cst_8 = arith.constant dense<0.000000e+00> : vector<16x512xf32>
    %10 = tpu.matmul %8, %9, %cst_8 {dimension_numbers = #tpu.dot_dimension_numbers<[1], [0], [0], [1], [0, 0, 1, 1], [], []>} : vector<16x256xbf16>, vector<256x512xbf16>, vector<16x512xf32> -> vector<16x512xf32>
    %c0_9 = arith.constant 0 : index
    %c0_10 = arith.constant 0 : index
    %11 = vector.load %arg5[%c0_9, %c0_10] : memref<1x512xf32, #tpu.memory_space<vmem>>, vector<1x512xf32>
    %12 = vector.broadcast %11 : vector<1x512xf32> to vector<16x512xf32>
    %13 = arith.addf %10, %12 : vector<16x512xf32>
    %cst_11 = arith.constant 0.000000e+00 : f32
    %14 = vector.broadcast %cst_11 : f32 to vector<16x512xf32>
    %15 = arith.maximumf %13, %14 : vector<16x512xf32>
    %16 = arith.truncf %15 : vector<16x512xf32> to vector<16x512xbf16>
    %c0_12 = arith.constant 0 : index
    %c0_13 = arith.constant 0 : index
    %17 = vector.load %arg6[%c0_12, %c0_13] : memref<512x128xbf16, #tpu.memory_space<vmem>>, vector<512x128xbf16>
    %cst_14 = arith.constant dense<0.000000e+00> : vector<16x128xf32>
    %18 = tpu.matmul %16, %17, %cst_14 {dimension_numbers = #tpu.dot_dimension_numbers<[1], [0], [0], [1], [0, 0, 1, 1], [], []>} : vector<16x512xbf16>, vector<512x128xbf16>, vector<16x128xf32> -> vector<16x128xf32>
    %c0_15 = arith.constant 0 : index
    %c0_16 = arith.constant 0 : index
    %19 = vector.load %arg7[%c0_15, %c0_16] : memref<1x128xf32, #tpu.memory_space<vmem>>, vector<1x128xf32>
    %20 = vector.broadcast %19 : vector<1x128xf32> to vector<16x128xf32>
    %21 = arith.addf %18, %20 : vector<16x128xf32>
    %cst_17 = arith.constant 2.000000e+00 : f32
    %22 = vector.broadcast %cst_17 : f32 to vector<16x128xf32>
    %23 = arith.mulf %21, %22 : vector<16x128xf32>
    %24 = arith.negf %23 : vector<16x128xf32>
    %25 = math.exp %24 : vector<16x128xf32>
    %cst_18 = arith.constant 1.000000e+00 : f32
    %26 = vector.broadcast %cst_18 : f32 to vector<16x128xf32>
    %27 = arith.addf %26, %25 : vector<16x128xf32>
    %28 = arith.divf %26, %27 : vector<16x128xf32>
    %c0_19 = arith.constant 0 : index
    %c0_20 = arith.constant 0 : index
    %29 = vector.load %arg8[%c0_19, %c0_20] : memref<16x128xf32, #tpu.memory_space<vmem>>, vector<16x128xf32>
    tpu.vector_store %arg8[%c0_19, %c0_20], %28 {strides = array<i32>} : memref<16x128xf32, #tpu.memory_space<vmem>>, vector<16x128xf32>,
    return
  }
  func.func @transform_0(%arg0: i32) -> (i32, i32) {
    %c0_i32 = arith.constant 0 : i32
    %c0_i32_0 = arith.constant 0 : i32
    %c0_i32_1 = arith.constant 0 : i32
    return %c0_i32, %c0_i32_0 : i32, i32
  }
  func.func @transform_1(%arg0: i32) -> (i32, i32) {
    %c0_i32 = arith.constant 0 : i32
    %c0_i32_0 = arith.constant 0 : i32
    %c0_i32_1 = arith.constant 0 : i32
    return %c0_i32, %c0_i32_0 : i32, i32
  }
  func.func @transform_2(%arg0: i32) -> (i32, i32) {
    %c0_i32 = arith.constant 0 : i32
    %c0_i32_0 = arith.constant 0 : i32
    %c0_i32_1 = arith.constant 0 : i32
    return %c0_i32, %c0_i32_0 : i32, i32
  }
  func.func @transform_3(%arg0: i32) -> (i32, i32) {
    %c0_i32 = arith.constant 0 : i32
    %c0_i32_0 = arith.constant 0 : i32
    %c0_i32_1 = arith.constant 0 : i32
    return %c0_i32, %c0_i32_0 : i32, i32
  }
  func.func @transform_4(%arg0: i32) -> (i32, i32) {
    %c0_i32 = arith.constant 0 : i32
    %c0_i32_0 = arith.constant 0 : i32
    %c0_i32_1 = arith.constant 0 : i32
    return %c0_i32, %c0_i32_0 : i32, i32
  }
  func.func @transform_5(%arg0: i32) -> (i32, i32) {
    %c0_i32 = arith.constant 0 : i32
    %c0_i32_0 = arith.constant 0 : i32
    return %c0_i32, %arg0 : i32, i32
  }
  func.func @transform_6(%arg0: i32) -> (i32, i32) {
    %c0_i32 = arith.constant 0 : i32
    %c0_i32_0 = arith.constant 0 : i32
    return %c0_i32, %arg0 : i32, i32
  }
  func.func @transform_7(%arg0: i32) -> (i32, i32) {
    %c0_i32 = arith.constant 0 : i32
    %c0_i32_0 = arith.constant 0 : i32
    return %c0_i32, %arg0 : i32, i32
  }
}

</mosaic_0001>

<llo_original>
// kernel: fc_mask_generator_forward.1
$region0: #{fc_mask_generator_forward.1}
  #allocation0 [shape = 'u32[]', space=smem, size = 0x4, offset = 0x4, fixed_abs, tag = 'smem constant byte address 0x4 - core index']
  #allocation1 [shape = 'u32[144,128]{1,0:T(1,128)}', space=vmem, size = 0x12000, scoped, tag = 'internal scratch']
  %s0 = inlined_call_operand.vmem [shape: bf16[16,32], index: 0, kind: input, shape index: {}]
  %s1 = inlined_call_operand.hbm [shape: bf16[32,256], index: 1, kind: input, shape index: {}]
  %s2 = inlined_call_operand.vmem [shape: f32[1,256], index: 2, kind: input, shape index: {}]
  %s3 = inlined_call_operand.hbm [shape: bf16[256,512], index: 3, kind: input, shape index: {}]
  %s4 = inlined_call_operand.vmem [shape: f32[1,512], index: 4, kind: input, shape index: {}]
  %s5 = inlined_call_operand.hbm [shape: bf16[512,256], index: 5, kind: input, shape index: {}]
  %s6 = inlined_call_operand.vmem [shape: f32[1,256], index: 6, kind: input, shape index: {}]
  %s7 = inlined_call_operand.vmem [shape: f32[16,256], index: 7, kind: output, shape index: {}]
  %s8 = sld [smem:[#allocation0]]
  $region107: #{fc_mask_generator_forward.1} parent=0
    _
  %s10 = ssub.s32 1, %s8
  %s11 = scalar_select 0, %s10, %s8
  $region1: #{fc_mask_generator_forward.1} parent=0
    #allocation2 [shape = 'u8[16384]{0}', space=vmem, size = 0x4000, scoped, tag = 'input window, operand 1, single buffered']
    #allocation3 [shape = 's32[2]{0}', space=sflag, size = 0x8, scoped, tag = 'scoped memory for fc_mask_generator_forward.1']
    #allocation4 [shape = 'u8[262144]{0}', space=vmem, size = 0x40000, scoped, tag = 'input window, operand 3, single buffered']
    #allocation5 [shape = 's32[1]{0}', space=sflag, size = 0x4, scoped, tag = 'scoped memory for fc_mask_generator_forward.1']
    #allocation6 [shape = 'u8[262144]{0}', space=vmem, size = 0x40000, scoped, tag = 'input window, operand 5']
    #allocation7 [shape = 'u8[16384]{0}', space=vmem, size = 0x4000, scoped, tag = 'output window, operand 0']
    %12 = vsyncpa [#allocation3], 0
    %13 = vsyncpa [#allocation5], 0
    loop: start=0, step=1, limit=4
    $region2: #{fc_mask_generator_forward.1} parent=1 // loop_pre_header
      _
    $region3: #{fc_mask_generator_forward.1} parent=1 // loop_header
      %s15 = sphi 0, %s19
      %p16 = scmp.ge.s32.totalorder %s15, 4
      %s23 = sphi 0, %s23
      %s25 = sphi 0, %s23
      %s26 = sphi 0, %s25
      %s40 = sphi 0, %s26
      %s44 = sphi 0, %s44
      %s46 = sphi 0, %s44
      %s47 = sphi 0, %s46
      %s61 = sphi 0, %s47
      %s65 = sphi 0, %s65
      %s67 = sphi 0, %s65
      %s68 = sphi 0, %s67
      %s82 = sphi 0, %s68
      %s86 = sphi 0, %s86
      %s88 = sphi 0, %s86
      %s89 = sphi 0, %s88
      %s103 = sphi 0, %s89
      %s107 = sphi 0, %s107
      %s109 = sphi 0, %s107
      %s110 = sphi 0, %s109
      %s124 = sphi 0, %s110
      %s130 = sphi 0, %s132
      %s133 = sphi 0, %s130
      %s134 = sphi 0, %s133
      %s150 = sphi 0, %s134
      %s156 = sphi 0, %s158
      %s159 = sphi 0, %s156
      %s160 = sphi 0, %s159
      %s176 = sphi 0, %s160
      %s182 = sphi 0, %s184
      %s185 = sphi 0, %s182
      %s186 = sphi 0, %s185
      %s202 = sphi 0, %s186
    $region4: #{fc_mask_generator_forward.1} parent=1 // loop_header_branch
      %18 = sbr.rel (%p16) target = $region8
    $region5: #{fc_mask_generator_forward.1} parent=1 // loop_body
      %s20 = ssub.s32 %s15, 1
      %s21 = ssub.s32 %s15, 2
      %s22 = sadd.s32 %s15, 1
      %s24 = sadd.s32 %s23, 1
      %p27 = scmp.eq.s32.totalorder %s15, 1
      %p28 = scmp.ne.s32.totalorder %s23, %s25
      %p29 = scmp.eq.s32.totalorder %s15, 0
      %p30 = por %p28, %p29
      %p31 = scmp.ne.s32.totalorder %s23, %s25
      %p32 = scmp.eq.s32.totalorder %s20, 1
      %p33 = por %p31, %p32
      %p34 = scmp.ne.s32.totalorder %s25, %s26
      %p35 = scmp.eq.s32.totalorder %s20, 0
      %p36 = por %p34, %p35
      %p37 = scmp.ne.s32.totalorder %s25, %s26
      %p38 = scmp.eq.s32.totalorder %s21, 1
      %p39 = por %p37, %p38
      %p41 = scmp.ne.s32.totalorder %s26, %s40
      %p42 = scmp.eq.s32.totalorder %s21, 0
      %p43 = por %p41, %p42
      %s45 = sadd.s32 %s44, 1
      %p48 = scmp.eq.s32.totalorder %s15, 1
      %p49 = scmp.ne.s32.totalorder %s44, %s46
      %p50 = scmp.eq.s32.totalorder %s15, 0
      %p51 = por %p49, %p50
      %p52 = scmp.ne.s32.totalorder %s44, %s46
      %p53 = scmp.eq.s32.totalorder %s20, 1
      %p54 = por %p52, %p53
      %p55 = scmp.ne.s32.totalorder %s46, %s47
      %p56 = scmp.eq.s32.totalorder %s20, 0
      %p57 = por %p55, %p56
      %p58 = scmp.ne.s32.totalorder %s46, %s47
      %p59 = scmp.eq.s32.totalorder %s21, 1
      %p60 = por %p58, %p59
      %p62 = scmp.ne.s32.totalorder %s47, %s61
      %p63 = scmp.eq.s32.totalorder %s21, 0
      %p64 = por %p62, %p63
      %s66 = sadd.s32 %s65, 1
      %p69 = scmp.eq.s32.totalorder %s15, 1
      %p70 = scmp.ne.s32.totalorder %s65, %s67
      %p71 = scmp.eq.s32.totalorder %s15, 0
      %p72 = por %p70, %p71
      %p73 = scmp.ne.s32.totalorder %s65, %s67
      %p74 = scmp.eq.s32.totalorder %s20, 1
      %p75 = por %p73, %p74
      %p76 = scmp.ne.s32.totalorder %s67, %s68
      %p77 = scmp.eq.s32.totalorder %s20, 0
      %p78 = por %p76, %p77
      %p79 = scmp.ne.s32.totalorder %s67, %s68
      %p80 = scmp.eq.s32.totalorder %s21, 1
      %p81 = por %p79, %p80
      %p83 = scmp.ne.s32.totalorder %s68, %s82
      %p84 = scmp.eq.s32.totalorder %s21, 0
      %p85 = por %p83, %p84
      %s87 = sadd.s32 %s86, 1
      %p90 = scmp.eq.s32.totalorder %s15, 1
      %p91 = scmp.ne.s32.totalorder %s86, %s88
      %p92 = scmp.eq.s32.totalorder %s15, 0
      %p93 = por %p91, %p92
      %p94 = scmp.ne.s32.totalorder %s86, %s88
      %p95 = scmp.eq.s32.totalorder %s20, 1
      %p96 = por %p94, %p95
      %p97 = scmp.ne.s32.totalorder %s88, %s89
      %p98 = scmp.eq.s32.totalorder %s20, 0
      %p99 = por %p97, %p98
      %p100 = scmp.ne.s32.totalorder %s88, %s89
      %p101 = scmp.eq.s32.totalorder %s21, 1
      %p102 = por %p100, %p101
      %p104 = scmp.ne.s32.totalorder %s89, %s103
      %p105 = scmp.eq.s32.totalorder %s21, 0
      %p106 = por %p104, %p105
      %s108 = sadd.s32 %s107, 1
      %p111 = scmp.eq.s32.totalorder %s15, 1
      %p112 = scmp.ne.s32.totalorder %s107, %s109
      %p113 = scmp.eq.s32.totalorder %s15, 0
      %p114 = por %p112, %p113
      %p115 = scmp.ne.s32.totalorder %s107, %s109
      %p116 = scmp.eq.s32.totalorder %s20, 1
      %p117 = por %p115, %p116
      %p118 = scmp.ne.s32.totalorder %s109, %s110
      %p119 = scmp.eq.s32.totalorder %s20, 0
      %p120 = por %p118, %p119
      %p121 = scmp.ne.s32.totalorder %s109, %s110
      %p122 = scmp.eq.s32.totalorder %s21, 1
      %p123 = por %p121, %p122
      %p125 = scmp.ne.s32.totalorder %s110, %s124
      %p126 = scmp.eq.s32.totalorder %s21, 0
      %p127 = por %p125, %p126
      %s128 = ssub.s32 %s15, %s22
      %p129 = scmp.eq.s32.totalorder %s128, 0
      %s131 = sadd.s32 %s130, 1
      %s132 = scalar_select %p129, %s130, %s131
      %p135 = pneg %p129
      %p136 = scmp.eq.s32.totalorder %s15, 1
      %p137 = por %p135, %p136
      %p138 = scmp.ne.s32.totalorder %s130, %s133
      %p139 = scmp.eq.s32.totalorder %s15, 0
      %p140 = por %p138, %p139
      %p141 = scmp.ne.s32.totalorder %s130, %s133
      %p142 = scmp.eq.s32.totalorder %s20, 1
      %p143 = por %p141, %p142
      %p144 = scmp.ne.s32.totalorder %s133, %s134
      %p145 = scmp.eq.s32.totalorder %s20, 0
      %p146 = por %p144, %p145
      %p147 = scmp.ne.s32.totalorder %s133, %s134
      %p148 = scmp.eq.s32.totalorder %s21, 1
      %p149 = por %p147, %p148
      %p151 = scmp.ne.s32.totalorder %s134, %s150
      %p152 = scmp.eq.s32.totalorder %s21, 0
      %p153 = por %p151, %p152
      %s154 = ssub.s32 %s15, %s22
      %p155 = scmp.eq.s32.totalorder %s154, 0
      %s157 = sadd.s32 %s156, 1
      %s158 = scalar_select %p155, %s156, %s157
      %p161 = pneg %p155
      %p162 = scmp.eq.s32.totalorder %s15, 1
      %p163 = por %p161, %p162
      %p164 = scmp.ne.s32.totalorder %s156, %s159
      %p165 = scmp.eq.s32.totalorder %s15, 0
      %p166 = por %p164, %p165
      %p167 = scmp.ne.s32.totalorder %s156, %s159
      %p168 = scmp.eq.s32.totalorder %s20, 1
      %p169 = por %p167, %p168
      %p170 = scmp.ne.s32.totalorder %s159, %s160
      %p171 = scmp.eq.s32.totalorder %s20, 0
      %p172 = por %p170, %p171
      %p173 = scmp.ne.s32.totalorder %s159, %s160
      %p174 = scmp.eq.s32.totalorder %s21, 1
      %p175 = por %p173, %p174
      %p177 = scmp.ne.s32.totalorder %s160, %s176
      %p178 = scmp.eq.s32.totalorder %s21, 0
      %p179 = por %p177, %p178
      %s180 = ssub.s32 %s15, %s22
      %p181 = scmp.eq.s32.totalorder %s180, 0
      %s183 = sadd.s32 %s182, 1
      %s184 = scalar_select %p181, %s182, %s183
      %p187 = pneg %p181
      %p188 = scmp.eq.s32.totalorder %s15, 1
      %p189 = por %p187, %p188
      %p190 = scmp.ne.s32.totalorder %s182, %s185
      %p191 = scmp.eq.s32.totalorder %s15, 0
      %p192 = por %p190, %p191
      %p193 = scmp.ne.s32.totalorder %s182, %s185
      %p194 = scmp.eq.s32.totalorder %s20, 1
      %p195 = por %p193, %p194
      %p196 = scmp.ne.s32.totalorder %s185, %s186
      %p197 = scmp.eq.s32.totalorder %s20, 0
      %p198 = por %p196, %p197
      %p199 = scmp.ne.s32.totalorder %s185, %s186
      %p200 = scmp.eq.s32.totalorder %s21, 1
      %p201 = por %p199, %p200
      %p203 = scmp.ne.s32.totalorder %s186, %s202
      %p204 = scmp.eq.s32.totalorder %s21, 0
      %p205 = por %p203, %p204
      %p206 = scmp.le.s32.totalorder 1, %s15
      %p207 = scmp.lt.s32.totalorder %s15, 3
      %p208 = pnand %p206, %p207
      %p209 = pneg %p208
      // Predicated region
      $region9: #{fc_mask_generator_forward.1} parent=5 // pred_check
        _
      $region10: #{fc_mask_generator_forward.1} parent=5 // pred_check_branch
        %211 = sbr.rel (%p208) target = $region12
      $region11: #{fc_mask_generator_forward.1} parent=5 // pred_region
        %s212 = ssub.s32 %s15, 1
        // Predicated region
        $region13: #{fc_mask_generator_forward.1} parent=11 // pred_check
          %p213 = pneg %p36
        $region14: #{fc_mask_generator_forward.1} parent=11 // pred_check_branch
          %215 = sbr.rel (%p213) target = $region16
        $region15: #{fc_mask_generator_forward.1} parent=11 // pred_region
          _
        $region16: #{fc_mask_generator_forward.1} parent=11 // pred_fallthru
          _
        // Predicated region
        $region17: #{fc_mask_generator_forward.1} parent=11 // pred_check
          %p216 = pneg %p57
        $region18: #{fc_mask_generator_forward.1} parent=11 // pred_check_branch
          %218 = sbr.rel (%p216) target = $region20
        $region19: #{fc_mask_generator_forward.1} parent=11 // pred_region
          %s220 = ssub.s32 512, 512
          %221 = vsyncadd [#allocation3], %s220
          %s222 = sshll.u32 [#allocation2], 4
          %s223 = int_to_ptr.vmem [resolvable:$true] %s222
          %228 = dma.hbm_to_vmem [thread:$0]  %s1, 512, %s223, [#allocation3], 128, 128, 8
        $region20: #{fc_mask_generator_forward.1} parent=11 // pred_fallthru
          _
        // Predicated region
        $region21: #{fc_mask_generator_forward.1} parent=11 // pred_check
          %p229 = pneg %p78
        $region22: #{fc_mask_generator_forward.1} parent=11 // pred_check_branch
          %231 = sbr.rel (%p229) target = $region24
        $region23: #{fc_mask_generator_forward.1} parent=11 // pred_region
          _
        $region24: #{fc_mask_generator_forward.1} parent=11 // pred_fallthru
          _
        // Predicated region
        $region25: #{fc_mask_generator_forward.1} parent=11 // pred_check
          %p232 = pneg %p99
        $region26: #{fc_mask_generator_forward.1} parent=11 // pred_check_branch
          %234 = sbr.rel (%p232) target = $region28
        $region27: #{fc_mask_generator_forward.1} parent=11 // pred_region
          %s236 = ssub.s32 8192, 8192
          %237 = vsyncadd [#allocation5], %s236
          %s238 = sshll.u32 [#allocation4], 4
          %s239 = int_to_ptr.vmem [resolvable:$true] %s238
          %244 = dma.hbm_to_vmem [thread:$0]  %s3, 8192, %s239, [#allocation5], 256, 256, 16
        $region28: #{fc_mask_generator_forward.1} parent=11 // pred_fallthru
          _
        // Predicated region
        $region29: #{fc_mask_generator_forward.1} parent=11 // pred_check
          %p245 = pneg %p120
        $region30: #{fc_mask_generator_forward.1} parent=11 // pred_check_branch
          %247 = sbr.rel (%p245) target = $region32
        $region31: #{fc_mask_generator_forward.1} parent=11 // pred_region
          _
        $region32: #{fc_mask_generator_forward.1} parent=11 // pred_fallthru
          _
      $region12: #{fc_mask_generator_forward.1} parent=5 // pred_fallthru
        _
      %p248 = scmp.lt.s32.totalorder %s15, 2
      // Predicated region
      $region33: #{fc_mask_generator_forward.1} parent=5 // pred_check
        %p249 = pneg %p248
      $region34: #{fc_mask_generator_forward.1} parent=5 // pred_check_branch
        %251 = sbr.rel (%p249) target = $region36
      $region35: #{fc_mask_generator_forward.1} parent=5 // pred_region
        // Predicated region
        $region37: #{fc_mask_generator_forward.1} parent=35 // pred_check
          %p252 = pneg %p140
        $region38: #{fc_mask_generator_forward.1} parent=35 // pred_check_branch
          %254 = sbr.rel (%p252) target = $region40
        $region39: #{fc_mask_generator_forward.1} parent=35 // pred_region
          %s255 = sand.u32 %s15, 1
          %s256 = scalar_lea.sflag [#allocation3], %s255
          %s257 = sand.u32 %s130, 1
          %s258 = smul.addr %s257, 256
          %s259 = scalar_lea.vmem [#allocation6], %s258
          %s261 = ssub.s32 4096, 4096
          %262 = vsyncadd %s256, %s261
          %s263 = smul.addr %s15, 64
          %s264 = scalar_lea.hbm %s5, %s263
          %s265 = sshll.u32 %s259, 4
          %s266 = int_to_ptr.vmem [resolvable:$true] %s265
          %271 = dma.hbm_to_vmem [thread:$0]  %s264, 4096, %s266, %s256, 128, 64, 4
        $region40: #{fc_mask_generator_forward.1} parent=35 // pred_fallthru
          _
        // Predicated region
        $region41: #{fc_mask_generator_forward.1} parent=35 // pred_check
          %p272 = pneg %p166
        $region42: #{fc_mask_generator_forward.1} parent=35 // pred_check_branch
          %274 = sbr.rel (%p272) target = $region44
        $region43: #{fc_mask_generator_forward.1} parent=35 // pred_region
          %p275 = scmp.lt.s32.totalorder %s15, 1
          %s276 = scalar_select %p275, %s15, 1
          %s277 = scalar_lea.vmem %s6, %s276
        $region44: #{fc_mask_generator_forward.1} parent=35 // pred_fallthru
          _
      $region36: #{fc_mask_generator_forward.1} parent=5 // pred_fallthru
        _
      %p278 = scmp.le.s32.totalorder 1, %s15
      %p279 = scmp.lt.s32.totalorder %s15, 3
      %p280 = pnand %p278, %p279
      %p281 = pneg %p280
      // Predicated region
      $region45: #{fc_mask_generator_forward.1} parent=5 // pred_check
        _
      $region46: #{fc_mask_generator_forward.1} parent=5 // pred_check_branch
        %283 = sbr.rel (%p280) target = $region48
      $region47: #{fc_mask_generator_forward.1} parent=5 // pred_region
        %s284 = ssub.s32 %s15, 1
        // Predicated region
        $region49: #{fc_mask_generator_forward.1} parent=47 // pred_check
          %p285 = pneg %p57
        $region50: #{fc_mask_generator_forward.1} parent=47 // pred_check_branch
          %287 = sbr.rel (%p285) target = $region52
        $region51: #{fc_mask_generator_forward.1} parent=47 // pred_region
          %288 = dma.done [#allocation3], 512
        $region52: #{fc_mask_generator_forward.1} parent=47 // pred_fallthru
          _
        // Predicated region
        $region53: #{fc_mask_generator_forward.1} parent=47 // pred_check
          %p289 = pneg %p99
        $region54: #{fc_mask_generator_forward.1} parent=47 // pred_check_branch
          %291 = sbr.rel (%p289) target = $region56
        $region55: #{fc_mask_generator_forward.1} parent=47 // pred_region
          %292 = dma.done [#allocation5], 8192
        $region56: #{fc_mask_generator_forward.1} parent=47 // pred_fallthru
          _
        %s293 = sand.u32 %s20, 1
        %s294 = scalar_lea.sflag [#allocation3], %s293
        %s295 = sand.u32 %s133, 1
        %s296 = smul.addr %s295, 256
        %s297 = scalar_lea.vmem [#allocation6], %s296
        // Predicated region
        $region57: #{fc_mask_generator_forward.1} parent=47 // pred_check
          %p298 = pneg %p146
        $region58: #{fc_mask_generator_forward.1} parent=47 // pred_check_branch
          %300 = sbr.rel (%p298) target = $region60
        $region59: #{fc_mask_generator_forward.1} parent=47 // pred_region
          %301 = dma.done %s294, 4096
        $region60: #{fc_mask_generator_forward.1} parent=47 // pred_fallthru
          _
        %p302 = pneg %p36
        %p303 = pneg %p33
        %p304 = pneg %p57
        %p305 = pneg %p54
        %p306 = pneg %p78
        %p307 = pneg %p75
        %p308 = pneg %p99
        %p309 = pneg %p96
        %p310 = pneg %p120
        %p311 = pneg %p117
        %s312 = sand.u32 %s20, 1
        %s313 = scalar_lea.sflag [#allocation3], %s312
        %s314 = sand.u32 %s133, 1
        %s315 = smul.addr %s314, 256
        %s316 = scalar_lea.vmem [#allocation6], %s315
        %p317 = pneg %p146
        %p318 = pneg %p143
        %p319 = scmp.lt.s32.totalorder %s20, 1
        %s320 = scalar_select %p319, %s20, 1
        %s321 = scalar_lea.vmem %s6, %s320
        %p322 = pneg %p172
        %p323 = pneg %p169
        %p324 = pneg %p198
        %p325 = pneg %p195
        %s326 = sand.u32 %s185, 1
        %s327 = sand.u32 %s185, 1
        %s328 = smul.addr %s327, 16
        %s329 = scalar_lea.vmem [#allocation7], %s328
        %p330 = scmp.lt.s32.totalorder %s20, 1
        %s331 = scalar_select %p330, %s20, 1
        %s332 = scalar_lea.vmem %s6, %s331
        %v334 = vld [vmem:[%s0] sm:$0xf]
        %v335 = vld [vmem:[%s0 + $0x4] sm:$0xf]
        %v336 = vld [vmem:[#allocation2] sm:$0xff]
        %v337 = vld [vmem:[#allocation2 + $0x8] sm:$0xff]
        %v338 = vld [vmem:[#allocation2 + $0x10] sm:$0xff]
        %v339 = vld [vmem:[#allocation2 + $0x18] sm:$0xff]
        %v340 = vld [vmem:[%s2] sm:$0x3]
        %v342 = vlaneseq
        %v343 = vshrl.u32 %v342, 7
        %v344 = vsub.s32 0, %v343
        %v345 = vrot.slane %v340, %v344
        %v346 = vlaneseq
        %v347 = vshrl.u32 %v346, 7
        %v348 = vsub.s32 1, %v347
        %v349 = vrot.slane %v340, %v348
        %v354 = vunpack.c.l.b16 %v334
        %v355 = vunpack.c.l.b16 %v335
        %v356 = vpack.c.b16 %v355, %v354
        %v361 = vunpack.c.l.b16 %v336
        %v362 = vunpack.c.h.b16 %v336
        %v363 = vunpack.c.l.b16 %v337
        %v364 = vunpack.c.h.b16 %v337
        %v365 = vunpack.c.l.b16 %v338
        %v366 = vunpack.c.h.b16 %v338
        %v367 = vunpack.c.l.b16 %v339
        %v368 = vunpack.c.h.b16 %v339
        %v369 = vpack.c.b16 %v363, %v361
        %v370 = vpack.c.b16 %v364, %v362
        %v371 = vpack.c.b16 %v367, %v365
        %v372 = vpack.c.b16 %v368, %v366
        %vm377 = vcmask 261120
        %v379 = vsel %vm377, %v356, 0
        %381 = vmatprep.subr.bf16.mxu0 %v370
        %382 = vmatpush1.bf16.msra.mxu0 %v369
        %383 = vmatprep.subr.bf16.mxu0 %v372
        %384 = vmatpush1.bf16.msra.mxu0 %v371
        %385 = vmatprep.subr.bf16.mxu0 0
        %386 = vmatpush1.bf16.msra.mxu0 0
        %387 = vmatprep.subr.bf16.mxu0 0
        %388 = vmatpush1.bf16.msra.mxu0 0
        %389 = vmatprep.subr.bf16.mxu0 0
        %390 = vmatpush1.bf16.msra.mxu0 0
        %391 = vmatprep.subr.bf16.mxu0 0
        %392 = vmatpush1.bf16.msra.mxu0 0
        %393 = vmatprep.subr.bf16.mxu0 0
        %394 = vmatpush1.bf16.msra.mxu0 0
        %395 = vmatprep.subr.bf16.mxu0 0
        %396 = vmatpush1.bf16.msra.mxu0 0
        %397 = vmatprep.subr.bf16.mxu0 0
        %398 = vmatpush1.bf16.msra.mxu0 0
        %399 = vmatprep.subr.bf16.mxu0 0
        %400 = vmatpush1.bf16.msra.mxu0 0
        %401 = vmatprep.subr.bf16.mxu0 0
        %402 = vmatpush1.bf16.msra.mxu0 0
        %403 = vmatprep.subr.bf16.mxu0 0
        %404 = vmatpush1.bf16.msra.mxu0 0
        %405 = vmatprep.subr.bf16.mxu0 0
        %406 = vmatpush1.bf16.msra.mxu0 0
        %407 = vmatprep.subr.bf16.mxu0 0
        %408 = vmatpush1.bf16.msra.mxu0 0
        %409 = vmatprep.subr.bf16.mxu0 0
        %410 = vmatpush1.bf16.msra.mxu0 0
        %411 = vmatprep.subr.bf16.mxu0 0
        %412 = vmatpush1.bf16.msra.mxu0 0
        %413 = vmatprep.mubr.bf16.mxu0 0
        %414 = vmatmul.mubr.bf16.gmra.mrb[0].mxu0 %v379
        %v415 = vpop.f32.mrb[0].mxu0
        %v416 = vadd.f32 %v345, %v415
        %v417 = vpop.f32.mrb[0].mxu0
        %v418 = vadd.f32 %v349, %v417
        %v419 = vpop.f32.mrb[0].mxu0
        %v420 = vadd.f32 %v345, %v419
        %v421 = vpop.f32.mrb[0].mxu0
        %v422 = vadd.f32 %v349, %v421
        %423 = vdwg.mxu0
        %v424 = vmax.f32 %v416, 0.0
        %v425 = vmax.f32 %v418, 0.0
        %v426 = vmax.f32 %v420, 0.0
        %v427 = vmax.f32 %v422, 0.0
        %v428 = vpack.c.bf16 %v426, %v424
        %v429 = vpack.c.bf16 %v427, %v425
        %v430 = vld [vmem:[#allocation4] sm:$0xff]
        %v431 = vld [vmem:[#allocation4 + $0x8] sm:$0xff]
        %v432 = vld [vmem:[#allocation4 + $0x10] sm:$0xff]
        %v433 = vld [vmem:[#allocation4 + $0x18] sm:$0xff]
        %v434 = vld [vmem:[#allocation4 + $0x20] sm:$0xff]
        %v435 = vld [vmem:[#allocation4 + $0x28] sm:$0xff]
        %v436 = vld [vmem:[#allocation4 + $0x30] sm:$0xff]
        %v437 = vld [vmem:[#allocation4 + $0x38] sm:$0xff]
        %v438 = vld [vmem:[#allocation4 + $0x40] sm:$0xff]
        %v439 = vld [vmem:[#allocation4 + $0x48] sm:$0xff]
        %v440 = vld [vmem:[#allocation4 + $0x50] sm:$0xff]
        %v441 = vld [vmem:[#allocation4 + $0x58] sm:$0xff]
        %v442 = vld [vmem:[#allocation4 + $0x60] sm:$0xff]
        %v443 = vld [vmem:[#allocation4 + $0x68] sm:$0xff]
        %v444 = vld [vmem:[#allocation4 + $0x70] sm:$0xff]
        %v445 = vld [vmem:[#allocation4 + $0x78] sm:$0xff]
        %v446 = vld [vmem:[#allocation4 + $0x80] sm:$0xff]
        %v447 = vld [vmem:[#allocation4 + $0x88] sm:$0xff]
        %v448 = vld [vmem:[#allocation4 + $0x90] sm:$0xff]
        %v449 = vld [vmem:[#allocation4 + $0x98] sm:$0xff]
        %v450 = vld [vmem:[#allocation4 + $0xa0] sm:$0xff]
        %v451 = vld [vmem:[#allocation4 + $0xa8] sm:$0xff]
        %v452 = vld [vmem:[#allocation4 + $0xb0] sm:$0xff]
        %v453 = vld [vmem:[#allocation4 + $0xb8] sm:$0xff]
        %v454 = vld [vmem:[#allocation4 + $0xc0] sm:$0xff]
        %v455 = vld [vmem:[#allocation4 + $0xc8] sm:$0xff]
        %v456 = vld [vmem:[#allocation4 + $0xd0] sm:$0xff]
        %v457 = vld [vmem:[#allocation4 + $0xd8] sm:$0xff]
        %v458 = vld [vmem:[#allocation4 + $0xe0] sm:$0xff]
        %v459 = vld [vmem:[#allocation4 + $0xe8] sm:$0xff]
        %v460 = vld [vmem:[#allocation4 + $0xf0] sm:$0xff]
        %v461 = vld [vmem:[#allocation4 + $0xf8] sm:$0xff]
        %v462 = vld [vmem:[#allocation4 + $0x100] sm:$0xff]
        %v463 = vld [vmem:[#allocation4 + $0x108] sm:$0xff]
        %v464 = vld [vmem:[#allocation4 + $0x110] sm:$0xff]
        %v465 = vld [vmem:[#allocation4 + $0x118] sm:$0xff]
        %v466 = vld [vmem:[#allocation4 + $0x120] sm:$0xff]
        %v467 = vld [vmem:[#allocation4 + $0x128] sm:$0xff]
        %v468 = vld [vmem:[#allocation4 + $0x130] sm:$0xff]
        %v469 = vld [vmem:[#allocation4 + $0x138] sm:$0xff]
        %v470 = vld [vmem:[#allocation4 + $0x140] sm:$0xff]
        %v471 = vld [vmem:[#allocation4 + $0x148] sm:$0xff]
        %v472 = vld [vmem:[#allocation4 + $0x150] sm:$0xff]
        %v473 = vld [vmem:[#allocation4 + $0x158] sm:$0xff]
        %v474 = vld [vmem:[#allocation4 + $0x160] sm:$0xff]
        %v475 = vld [vmem:[#allocation4 + $0x168] sm:$0xff]
        %v476 = vld [vmem:[#allocation4 + $0x170] sm:$0xff]
        %v477 = vld [vmem:[#allocation4 + $0x178] sm:$0xff]
        %v478 = vld [vmem:[#allocation4 + $0x180] sm:$0xff]
        %v479 = vld [vmem:[#allocation4 + $0x188] sm:$0xff]
        %v480 = vld [vmem:[#allocation4 + $0x190] sm:$0xff]
        %v481 = vld [vmem:[#allocation4 + $0x198] sm:$0xff]
        %v482 = vld [vmem:[#allocation4 + $0x1a0] sm:$0xff]
        %v483 = vld [vmem:[#allocation4 + $0x1a8] sm:$0xff]
        %v484 = vld [vmem:[#allocation4 + $0x1b0] sm:$0xff]
        %v485 = vld [vmem:[#allocation4 + $0x1b8] sm:$0xff]
        %v486 = vld [vmem:[#allocation4 + $0x1c0] sm:$0xff]
        %v487 = vld [vmem:[#allocation4 + $0x1c8] sm:$0xff]
        %v488 = vld [vmem:[#allocation4 + $0x1d0] sm:$0xff]
        %v489 = vld [vmem:[#allocation4 + $0x1d8] sm:$0xff]
        %v490 = vld [vmem:[#allocation4 + $0x1e0] sm:$0xff]
        %v491 = vld [vmem:[#allocation4 + $0x1e8] sm:$0xff]
        %v492 = vld [vmem:[#allocation4 + $0x1f0] sm:$0xff]
        %v493 = vld [vmem:[#allocation4 + $0x1f8] sm:$0xff]
        %v494 = vld [vmem:[%s4] sm:$0xf]
        %v496 = vlaneseq
        %v497 = vshrl.u32 %v496, 7
        %v498 = vsub.s32 0, %v497
        %v499 = vrot.slane %v494, %v498
        %v500 = vlaneseq
        %v501 = vshrl.u32 %v500, 7
        %v502 = vsub.s32 1, %v501
        %v503 = vrot.slane %v494, %v502
        %v504 = vlaneseq
        %v505 = vshrl.u32 %v504, 7
        %v506 = vsub.s32 2, %v505
        %v507 = vrot.slane %v494, %v506
        %v508 = vlaneseq
        %v509 = vshrl.u32 %v508, 7
        %v510 = vsub.s32 3, %v509
        %v511 = vrot.slane %v494, %v510
        %v580 = vunpack.c.l.b16 %v430
        %v581 = vunpack.c.h.b16 %v430
        %v582 = vunpack.c.l.b16 %v431
        %v583 = vunpack.c.h.b16 %v431
        %v584 = vunpack.c.l.b16 %v432
        %v585 = vunpack.c.h.b16 %v432
        %v586 = vunpack.c.l.b16 %v433
        %v587 = vunpack.c.h.b16 %v433
        %v588 = vunpack.c.l.b16 %v434
        %v589 = vunpack.c.h.b16 %v434
        %v590 = vunpack.c.l.b16 %v435
        %v591 = vunpack.c.h.b16 %v435
        %v592 = vunpack.c.l.b16 %v436
        %v593 = vunpack.c.h.b16 %v436
        %v594 = vunpack.c.l.b16 %v437
        %v595 = vunpack.c.h.b16 %v437
        %v596 = vunpack.c.l.b16 %v438
        %v597 = vunpack.c.h.b16 %v438
        %v598 = vunpack.c.l.b16 %v439
        %v599 = vunpack.c.h.b16 %v439
        %v600 = vunpack.c.l.b16 %v440
        %v601 = vunpack.c.h.b16 %v440
        %v602 = vunpack.c.l.b16 %v441
        %v603 = vunpack.c.h.b16 %v441
        %v604 = vunpack.c.l.b16 %v442
        %v605 = vunpack.c.h.b16 %v442
        %v606 = vunpack.c.l.b16 %v443
        %v607 = vunpack.c.h.b16 %v443
        %v608 = vunpack.c.l.b16 %v444
        %v609 = vunpack.c.h.b16 %v444
        %v610 = vunpack.c.l.b16 %v445
        %v611 = vunpack.c.h.b16 %v445
        %v612 = vunpack.c.l.b16 %v446
        %v613 = vunpack.c.h.b16 %v446
        %v614 = vunpack.c.l.b16 %v447
        %v615 = vunpack.c.h.b16 %v447
        %v616 = vunpack.c.l.b16 %v448
        %v617 = vunpack.c.h.b16 %v448
        %v618 = vunpack.c.l.b16 %v449
        %v619 = vunpack.c.h.b16 %v449
        %v620 = vunpack.c.l.b16 %v450
        %v621 = vunpack.c.h.b16 %v450
        %v622 = vunpack.c.l.b16 %v451
        %v623 = vunpack.c.h.b16 %v451
        %v624 = vunpack.c.l.b16 %v452
        %v625 = vunpack.c.h.b16 %v452
        %v626 = vunpack.c.l.b16 %v453
        %v627 = vunpack.c.h.b16 %v453
        %v628 = vunpack.c.l.b16 %v454
        %v629 = vunpack.c.h.b16 %v454
        %v630 = vunpack.c.l.b16 %v455
        %v631 = vunpack.c.h.b16 %v455
        %v632 = vunpack.c.l.b16 %v456
        %v633 = vunpack.c.h.b16 %v456
        %v634 = vunpack.c.l.b16 %v457
        %v635 = vunpack.c.h.b16 %v457
        %v636 = vunpack.c.l.b16 %v458
        %v637 = vunpack.c.h.b16 %v458
        %v638 = vunpack.c.l.b16 %v459
        %v639 = vunpack.c.h.b16 %v459
        %v640 = vunpack.c.l.b16 %v460
        %v641 = vunpack.c.h.b16 %v460
        %v642 = vunpack.c.l.b16 %v461
        %v643 = vunpack.c.h.b16 %v461
        %v644 = vunpack.c.l.b16 %v462
        %v645 = vunpack.c.h.b16 %v462
        %v646 = vunpack.c.l.b16 %v463
        %v647 = vunpack.c.h.b16 %v463
        %v648 = vunpack.c.l.b16 %v464
        %v649 = vunpack.c.h.b16 %v464
        %v650 = vunpack.c.l.b16 %v465
        %v651 = vunpack.c.h.b16 %v465
        %v652 = vunpack.c.l.b16 %v466
        %v653 = vunpack.c.h.b16 %v466
        %v654 = vunpack.c.l.b16 %v467
        %v655 = vunpack.c.h.b16 %v467
        %v656 = vunpack.c.l.b16 %v468
        %v657 = vunpack.c.h.b16 %v468
        %v658 = vunpack.c.l.b16 %v469
        %v659 = vunpack.c.h.b16 %v469
        %v660 = vunpack.c.l.b16 %v470
        %v661 = vunpack.c.h.b16 %v470
        %v662 = vunpack.c.l.b16 %v471
        %v663 = vunpack.c.h.b16 %v471
        %v664 = vunpack.c.l.b16 %v472
        %v665 = vunpack.c.h.b16 %v472
        %v666 = vunpack.c.l.b16 %v473
        %v667 = vunpack.c.h.b16 %v473
        %v668 = vunpack.c.l.b16 %v474
        %v669 = vunpack.c.h.b16 %v474
        %v670 = vunpack.c.l.b16 %v475
        %v671 = vunpack.c.h.b16 %v475
        %v672 = vunpack.c.l.b16 %v476
        %v673 = vunpack.c.h.b16 %v476
        %v674 = vunpack.c.l.b16 %v477
        %v675 = vunpack.c.h.b16 %v477
        %v676 = vunpack.c.l.b16 %v478
        %v677 = vunpack.c.h.b16 %v478
        %v678 = vunpack.c.l.b16 %v479
        %v679 = vunpack.c.h.b16 %v479
        %v680 = vunpack.c.l.b16 %v480
        %v681 = vunpack.c.h.b16 %v480
        %v682 = vunpack.c.l.b16 %v481
        %v683 = vunpack.c.h.b16 %v481
        %v684 = vunpack.c.l.b16 %v482
        %v685 = vunpack.c.h.b16 %v482
        %v686 = vunpack.c.l.b16 %v483
        %v687 = vunpack.c.h.b16 %v483
        %v688 = vunpack.c.l.b16 %v484
        %v689 = vunpack.c.h.b16 %v484
        %v690 = vunpack.c.l.b16 %v485
        %v691 = vunpack.c.h.b16 %v485
        %v692 = vunpack.c.l.b16 %v486
        %v693 = vunpack.c.h.b16 %v486
        %v694 = vunpack.c.l.b16 %v487
        %v695 = vunpack.c.h.b16 %v487
        %v696 = vunpack.c.l.b16 %v488
        %v697 = vunpack.c.h.b16 %v488
        %v698 = vunpack.c.l.b16 %v489
        %v699 = vunpack.c.h.b16 %v489
        %v700 = vunpack.c.l.b16 %v490
        %v701 = vunpack.c.h.b16 %v490
        %v702 = vunpack.c.l.b16 %v491
        %v703 = vunpack.c.h.b16 %v491
        %v704 = vunpack.c.l.b16 %v492
        %v705 = vunpack.c.h.b16 %v492
        %v706 = vunpack.c.l.b16 %v493
        %v707 = vunpack.c.h.b16 %v493
        %v708 = vpack.c.b16 %v584, %v580
        %v709 = vpack.c.b16 %v585, %v581
        %v710 = vpack.c.b16 %v586, %v582
        %v711 = vpack.c.b16 %v587, %v583
        %v712 = vpack.c.b16 %v592, %v588
        %v713 = vpack.c.b16 %v593, %v589
        %v714 = vpack.c.b16 %v594, %v590
        %v715 = vpack.c.b16 %v595, %v591
        %v716 = vpack.c.b16 %v600, %v596
        %v717 = vpack.c.b16 %v601, %v597
        %v718 = vpack.c.b16 %v602, %v598
        %v719 = vpack.c.b16 %v603, %v599
        %v720 = vpack.c.b16 %v608, %v604
        %v721 = vpack.c.b16 %v609, %v605
        %v722 = vpack.c.b16 %v610, %v606
        %v723 = vpack.c.b16 %v611, %v607
        %v724 = vpack.c.b16 %v616, %v612
        %v725 = vpack.c.b16 %v617, %v613
        %v726 = vpack.c.b16 %v618, %v614
        %v727 = vpack.c.b16 %v619, %v615
        %v728 = vpack.c.b16 %v624, %v620
        %v729 = vpack.c.b16 %v625, %v621
        %v730 = vpack.c.b16 %v626, %v622
        %v731 = vpack.c.b16 %v627, %v623
        %v732 = vpack.c.b16 %v632, %v628
        %v733 = vpack.c.b16 %v633, %v629
        %v734 = vpack.c.b16 %v634, %v630
        %v735 = vpack.c.b16 %v635, %v631
        %v736 = vpack.c.b16 %v640, %v636
        %v737 = vpack.c.b16 %v641, %v637
        %v738 = vpack.c.b16 %v642, %v638
        %v739 = vpack.c.b16 %v643, %v639
        %v740 = vpack.c.b16 %v648, %v644
        %v741 = vpack.c.b16 %v649, %v645
        %v742 = vpack.c.b16 %v650, %v646
        %v743 = vpack.c.b16 %v651, %v647
        %v744 = vpack.c.b16 %v656, %v652
        %v745 = vpack.c.b16 %v657, %v653
        %v746 = vpack.c.b16 %v658, %v654
        %v747 = vpack.c.b16 %v659, %v655
        %v748 = vpack.c.b16 %v664, %v660
        %v749 = vpack.c.b16 %v665, %v661
        %v750 = vpack.c.b16 %v666, %v662
        %v751 = vpack.c.b16 %v667, %v663
        %v752 = vpack.c.b16 %v672, %v668
        %v753 = vpack.c.b16 %v673, %v669
        %v754 = vpack.c.b16 %v674, %v670
        %v755 = vpack.c.b16 %v675, %v671
        %v756 = vpack.c.b16 %v680, %v676
        %v757 = vpack.c.b16 %v681, %v677
        %v758 = vpack.c.b16 %v682, %v678
        %v759 = vpack.c.b16 %v683, %v679
        %v760 = vpack.c.b16 %v688, %v684
        %v761 = vpack.c.b16 %v689, %v685
        %v762 = vpack.c.b16 %v690, %v686
        %v763 = vpack.c.b16 %v691, %v687
        %v764 = vpack.c.b16 %v696, %v692
        %v765 = vpack.c.b16 %v697, %v693
        %v766 = vpack.c.b16 %v698, %v694
        %v767 = vpack.c.b16 %v699, %v695
        %v768 = vpack.c.b16 %v704, %v700
        %v769 = vpack.c.b16 %v705, %v701
        %v770 = vpack.c.b16 %v706, %v702
        %v771 = vpack.c.b16 %v707, %v703
        %836 = vmatprep.subr.bf16.mxu0 %v709
        %837 = vmatpush1.bf16.msra.mxu0 %v708
        %838 = vmatprep.subr.bf16.mxu0 %v713
        %839 = vmatpush1.bf16.msra.mxu0 %v712
        %840 = vmatprep.subr.bf16.mxu0 %v717
        %841 = vmatpush1.bf16.msra.mxu0 %v716
        %842 = vmatprep.subr.bf16.mxu0 %v721
        %843 = vmatpush1.bf16.msra.mxu0 %v720
        %844 = vmatprep.subr.bf16.mxu0 %v725
        %845 = vmatpush1.bf16.msra.mxu0 %v724
        %846 = vmatprep.subr.bf16.mxu0 %v729
        %847 = vmatpush1.bf16.msra.mxu0 %v728
        %848 = vmatprep.subr.bf16.mxu0 %v733
        %849 = vmatpush1.bf16.msra.mxu0 %v732
        %850 = vmatprep.subr.bf16.mxu0 %v737
        %851 = vmatpush1.bf16.msra.mxu0 %v736
        %852 = vmatprep.subr.bf16.mxu0 %v741
        %853 = vmatpush1.bf16.msra.mxu0 %v740
        %854 = vmatprep.subr.bf16.mxu0 %v745
        %855 = vmatpush1.bf16.msra.mxu0 %v744
        %856 = vmatprep.subr.bf16.mxu0 %v749
        %857 = vmatpush1.bf16.msra.mxu0 %v748
        %858 = vmatprep.subr.bf16.mxu0 %v753
        %859 = vmatpush1.bf16.msra.mxu0 %v752
        %860 = vmatprep.subr.bf16.mxu0 %v757
        %861 = vmatpush1.bf16.msra.mxu0 %v756
        %862 = vmatprep.subr.bf16.mxu0 %v761
        %863 = vmatpush1.bf16.msra.mxu0 %v760
        %864 = vmatprep.subr.bf16.mxu0 %v765
        %865 = vmatpush1.bf16.msra.mxu0 %v764
        %866 = vmatprep.subr.bf16.mxu0 %v769
        %867 = vmatpush1.bf16.msra.mxu0 %v768
        %868 = vmatprep.mubr.bf16.mxu0 %v429
        %869 = vmatmul.mubr.bf16.gmra.mrb[0].mxu0 %v428
        %v870 = vpop.f32.mrb[0].mxu0
        %v871 = vadd.f32 %v499, %v870
        %v872 = vpop.f32.mrb[0].mxu0
        %v873 = vadd.f32 %v503, %v872
        %v874 = vpop.f32.mrb[0].mxu0
        %v875 = vadd.f32 %v499, %v874
        %v876 = vpop.f32.mrb[0].mxu0
        %v877 = vadd.f32 %v503, %v876
        %878 = vdwg.mxu0
        %879 = vmatprep.subr.bf16.mxu0 %v711
        %880 = vmatpush1.bf16.msra.mxu0 %v710
        %881 = vmatprep.subr.bf16.mxu0 %v715
        %882 = vmatpush1.bf16.msra.mxu0 %v714
        %883 = vmatprep.subr.bf16.mxu0 %v719
        %884 = vmatpush1.bf16.msra.mxu0 %v718
        %885 = vmatprep.subr.bf16.mxu0 %v723
        %886 = vmatpush1.bf16.msra.mxu0 %v722
        %887 = vmatprep.subr.bf16.mxu0 %v727
        %888 = vmatpush1.bf16.msra.mxu0 %v726
        %889 = vmatprep.subr.bf16.mxu0 %v731
        %890 = vmatpush1.bf16.msra.mxu0 %v730
        %891 = vmatprep.subr.bf16.mxu0 %v735
        %892 = vmatpush1.bf16.msra.mxu0 %v734
        %893 = vmatprep.subr.bf16.mxu0 %v739
        %894 = vmatpush1.bf16.msra.mxu0 %v738
        %895 = vmatprep.subr.bf16.mxu0 %v743
        %896 = vmatpush1.bf16.msra.mxu0 %v742
        %897 = vmatprep.subr.bf16.mxu0 %v747
        %898 = vmatpush1.bf16.msra.mxu0 %v746
        %899 = vmatprep.subr.bf16.mxu0 %v751
        %900 = vmatpush1.bf16.msra.mxu0 %v750
        %901 = vmatprep.subr.bf16.mxu0 %v755
        %902 = vmatpush1.bf16.msra.mxu0 %v754
        %903 = vmatprep.subr.bf16.mxu0 %v759
        %904 = vmatpush1.bf16.msra.mxu0 %v758
        %905 = vmatprep.subr.bf16.mxu0 %v763
        %906 = vmatpush1.bf16.msra.mxu0 %v762
        %907 = vmatprep.subr.bf16.mxu0 %v767
        %908 = vmatpush1.bf16.msra.mxu0 %v766
        %909 = vmatprep.subr.bf16.mxu0 %v771
        %910 = vmatpush1.bf16.msra.mxu0 %v770
        %911 = vmatprep.mubr.bf16.mxu0 %v429
        %912 = vmatmul.mubr.bf16.gmra.mrb[0].mxu0 %v428
        %v913 = vpop.f32.mrb[0].mxu0
        %v914 = vadd.f32 %v507, %v913
        %v915 = vpop.f32.mrb[0].mxu0
        %v916 = vadd.f32 %v511, %v915
        %v917 = vpop.f32.mrb[0].mxu0
        %v918 = vadd.f32 %v507, %v917
        %v919 = vpop.f32.mrb[0].mxu0
        %v920 = vadd.f32 %v511, %v919
        %921 = vdwg.mxu0
        %v922 = vmax.f32 %v871, 0.0
        %v923 = vmax.f32 %v873, 0.0
        %v924 = vmax.f32 %v914, 0.0
        %v925 = vmax.f32 %v916, 0.0
        %v926 = vmax.f32 %v875, 0.0
        %v927 = vmax.f32 %v877, 0.0
        %v928 = vmax.f32 %v918, 0.0
        %v929 = vmax.f32 %v920, 0.0
        %v930 = vpack.c.bf16 %v926, %v922
        %v931 = vpack.c.bf16 %v927, %v923
        %v932 = vpack.c.bf16 %v928, %v924
        %v933 = vpack.c.bf16 %v929, %v925
        %v934 = vld [vmem:[%s297] sm:$0xf]
        %v935 = vld [vmem:[%s297 + $0x4] sm:$0xf]
        %v936 = vld [vmem:[%s297 + $0x8] sm:$0xf]
        %v937 = vld [vmem:[%s297 + $0xc] sm:$0xf]
        %v938 = vld [vmem:[%s297 + $0x10] sm:$0xf]
        %v939 = vld [vmem:[%s297 + $0x14] sm:$0xf]
        %v940 = vld [vmem:[%s297 + $0x18] sm:$0xf]
        %v941 = vld [vmem:[%s297 + $0x1c] sm:$0xf]
        %v942 = vld [vmem:[%s297 + $0x20] sm:$0xf]
        %v943 = vld [vmem:[%s297 + $0x24] sm:$0xf]
        %v944 = vld [vmem:[%s297 + $0x28] sm:$0xf]
        %v945 = vld [vmem:[%s297 + $0x2c] sm:$0xf]
        %v946 = vld [vmem:[%s297 + $0x30] sm:$0xf]
        %v947 = vld [vmem:[%s297 + $0x34] sm:$0xf]
        %v948 = vld [vmem:[%s297 + $0x38] sm:$0xf]
        %v949 = vld [vmem:[%s297 + $0x3c] sm:$0xf]
        %v950 = vld [vmem:[%s297 + $0x40] sm:$0xf]
        %v951 = vld [vmem:[%s297 + $0x44] sm:$0xf]
        %v952 = vld [vmem:[%s297 + $0x48] sm:$0xf]
        %v953 = vld [vmem:[%s297 + $0x4c] sm:$0xf]
        %v954 = vld [vmem:[%s297 + $0x50] sm:$0xf]
        %v955 = vld [vmem:[%s297 + $0x54] sm:$0xf]
        %v956 = vld [vmem:[%s297 + $0x58] sm:$0xf]
        %v957 = vld [vmem:[%s297 + $0x5c] sm:$0xf]
        %v958 = vld [vmem:[%s297 + $0x60] sm:$0xf]
        %v959 = vld [vmem:[%s297 + $0x64] sm:$0xf]
        %v960 = vld [vmem:[%s297 + $0x68] sm:$0xf]
        %v961 = vld [vmem:[%s297 + $0x6c] sm:$0xf]
        %v962 = vld [vmem:[%s297 + $0x70] sm:$0xf]
        %v963 = vld [vmem:[%s297 + $0x74] sm:$0xf]
        %v964 = vld [vmem:[%s297 + $0x78] sm:$0xf]
        %v965 = vld [vmem:[%s297 + $0x7c] sm:$0xf]
        %v966 = vld [vmem:[%s297 + $0x80] sm:$0xf]
        %v967 = vld [vmem:[%s297 + $0x84] sm:$0xf]
        %v968 = vld [vmem:[%s297 + $0x88] sm:$0xf]
        %v969 = vld [vmem:[%s297 + $0x8c] sm:$0xf]
        %v970 = vld [vmem:[%s297 + $0x90] sm:$0xf]
        %v971 = vld [vmem:[%s297 + $0x94] sm:$0xf]
        %v972 = vld [vmem:[%s297 + $0x98] sm:$0xf]
        %v973 = vld [vmem:[%s297 + $0x9c] sm:$0xf]
        %v974 = vld [vmem:[%s297 + $0xa0] sm:$0xf]
        %v975 = vld [vmem:[%s297 + $0xa4] sm:$0xf]
        %v976 = vld [vmem:[%s297 + $0xa8] sm:$0xf]
        %v977 = vld [vmem:[%s297 + $0xac] sm:$0xf]
        %v978 = vld [vmem:[%s297 + $0xb0] sm:$0xf]
        %v979 = vld [vmem:[%s297 + $0xb4] sm:$0xf]
        %v980 = vld [vmem:[%s297 + $0xb8] sm:$0xf]
        %v981 = vld [vmem:[%s297 + $0xbc] sm:$0xf]
        %v982 = vld [vmem:[%s297 + $0xc0] sm:$0xf]
        %v983 = vld [vmem:[%s297 + $0xc4] sm:$0xf]
        %v984 = vld [vmem:[%s297 + $0xc8] sm:$0xf]
        %v985 = vld [vmem:[%s297 + $0xcc] sm:$0xf]
        %v986 = vld [vmem:[%s297 + $0xd0] sm:$0xf]
        %v987 = vld [vmem:[%s297 + $0xd4] sm:$0xf]
        %v988 = vld [vmem:[%s297 + $0xd8] sm:$0xf]
        %v989 = vld [vmem:[%s297 + $0xdc] sm:$0xf]
        %v990 = vld [vmem:[%s297 + $0xe0] sm:$0xf]
        %v991 = vld [vmem:[%s297 + $0xe4] sm:$0xf]
        %v992 = vld [vmem:[%s297 + $0xe8] sm:$0xf]
        %v993 = vld [vmem:[%s297 + $0xec] sm:$0xf]
        %v994 = vld [vmem:[%s297 + $0xf0] sm:$0xf]
        %v995 = vld [vmem:[%s297 + $0xf4] sm:$0xf]
        %v996 = vld [vmem:[%s297 + $0xf8] sm:$0xf]
        %v997 = vld [vmem:[%s297 + $0xfc] sm:$0xf]
        %v998 = vld [vmem:[%s332] sm:$0x1]
        %v1000 = vlaneseq
        %v1001 = vshrl.u32 %v1000, 7
        %v1002 = vsub.s32 0, %v1001
        %v1003 = vrot.slane %v998, %v1002
        %v1069 = vunpack.c.l.b16 %v934
        %v1070 = vunpack.c.l.b16 %v935
        %v1071 = vunpack.c.l.b16 %v936
        %v1072 = vunpack.c.l.b16 %v937
        %v1073 = vunpack.c.l.b16 %v938
        %v1074 = vunpack.c.l.b16 %v939
        %v1075 = vunpack.c.l.b16 %v940
        %v1076 = vunpack.c.l.b16 %v941
        %v1077 = vunpack.c.l.b16 %v942
        %v1078 = vunpack.c.l.b16 %v943
        %v1079 = vunpack.c.l.b16 %v944
        %v1080 = vunpack.c.l.b16 %v945
        %v1081 = vunpack.c.l.b16 %v946
        %v1082 = vunpack.c.l.b16 %v947
        %v1083 = vunpack.c.l.b16 %v948
        %v1084 = vunpack.c.l.b16 %v949
        %v1085 = vunpack.c.l.b16 %v950
        %v1086 = vunpack.c.l.b16 %v951
        %v1087 = vunpack.c.l.b16 %v952
        %v1088 = vunpack.c.l.b16 %v953
        %v1089 = vunpack.c.l.b16 %v954
        %v1090 = vunpack.c.l.b16 %v955
        %v1091 = vunpack.c.l.b16 %v956
        %v1092 = vunpack.c.l.b16 %v957
        %v1093 = vunpack.c.l.b16 %v958
        %v1094 = vunpack.c.l.b16 %v959
        %v1095 = vunpack.c.l.b16 %v960
        %v1096 = vunpack.c.l.b16 %v961
        %v1097 = vunpack.c.l.b16 %v962
        %v1098 = vunpack.c.l.b16 %v963
        %v1099 = vunpack.c.l.b16 %v964
        %v1100 = vunpack.c.l.b16 %v965
        %v1101 = vunpack.c.l.b16 %v966
        %v1102 = vunpack.c.l.b16 %v967
        %v1103 = vunpack.c.l.b16 %v968
        %v1104 = vunpack.c.l.b16 %v969
        %v1105 = vunpack.c.l.b16 %v970
        %v1106 = vunpack.c.l.b16 %v971
        %v1107 = vunpack.c.l.b16 %v972
        %v1108 = vunpack.c.l.b16 %v973
        %v1109 = vunpack.c.l.b16 %v974
        %v1110 = vunpack.c.l.b16 %v975
        %v1111 = vunpack.c.l.b16 %v976
        %v1112 = vunpack.c.l.b16 %v977
        %v1113 = vunpack.c.l.b16 %v978
        %v1114 = vunpack.c.l.b16 %v979
        %v1115 = vunpack.c.l.b16 %v980
        %v1116 = vunpack.c.l.b16 %v981
        %v1117 = vunpack.c.l.b16 %v982
        %v1118 = vunpack.c.l.b16 %v983
        %v1119 = vunpack.c.l.b16 %v984
        %v1120 = vunpack.c.l.b16 %v985
        %v1121 = vunpack.c.l.b16 %v986
        %v1122 = vunpack.c.l.b16 %v987
        %v1123 = vunpack.c.l.b16 %v988
        %v1124 = vunpack.c.l.b16 %v989
        %v1125 = vunpack.c.l.b16 %v990
        %v1126 = vunpack.c.l.b16 %v991
        %v1127 = vunpack.c.l.b16 %v992
        %v1128 = vunpack.c.l.b16 %v993
        %v1129 = vunpack.c.l.b16 %v994
        %v1130 = vunpack.c.l.b16 %v995
        %v1131 = vunpack.c.l.b16 %v996
        %v1132 = vunpack.c.l.b16 %v997
        %v1133 = vpack.c.b16 %v1070, %v1069
        %v1134 = vpack.c.b16 %v1072, %v1071
        %v1135 = vpack.c.b16 %v1074, %v1073
        %v1136 = vpack.c.b16 %v1076, %v1075
        %v1137 = vpack.c.b16 %v1078, %v1077
        %v1138 = vpack.c.b16 %v1080, %v1079
        %v1139 = vpack.c.b16 %v1082, %v1081
        %v1140 = vpack.c.b16 %v1084, %v1083
        %v1141 = vpack.c.b16 %v1086, %v1085
        %v1142 = vpack.c.b16 %v1088, %v1087
        %v1143 = vpack.c.b16 %v1090, %v1089
        %v1144 = vpack.c.b16 %v1092, %v1091
        %v1145 = vpack.c.b16 %v1094, %v1093
        %v1146 = vpack.c.b16 %v1096, %v1095
        %v1147 = vpack.c.b16 %v1098, %v1097
        %v1148 = vpack.c.b16 %v1100, %v1099
        %v1149 = vpack.c.b16 %v1102, %v1101
        %v1150 = vpack.c.b16 %v1104, %v1103
        %v1151 = vpack.c.b16 %v1106, %v1105
        %v1152 = vpack.c.b16 %v1108, %v1107
        %v1153 = vpack.c.b16 %v1110, %v1109
        %v1154 = vpack.c.b16 %v1112, %v1111
        %v1155 = vpack.c.b16 %v1114, %v1113
        %v1156 = vpack.c.b16 %v1116, %v1115
        %v1157 = vpack.c.b16 %v1118, %v1117
        %v1158 = vpack.c.b16 %v1120, %v1119
        %v1159 = vpack.c.b16 %v1122, %v1121
        %v1160 = vpack.c.b16 %v1124, %v1123
        %v1161 = vpack.c.b16 %v1126, %v1125
        %v1162 = vpack.c.b16 %v1128, %v1127
        %v1163 = vpack.c.b16 %v1130, %v1129
        %v1164 = vpack.c.b16 %v1132, %v1131
        %1197 = vmatprep.subr.bf16.mxu0 0
        %1198 = vmatpush1.bf16.msra.mxu0 %v1133
        %1199 = vmatprep.subr.bf16.mxu0 0
        %1200 = vmatpush1.bf16.msra.mxu0 %v1134
        %1201 = vmatprep.subr.bf16.mxu0 0
        %1202 = vmatpush1.bf16.msra.mxu0 %v1135
        %1203 = vmatprep.subr.bf16.mxu0 0
        %1204 = vmatpush1.bf16.msra.mxu0 %v1136
        %1205 = vmatprep.subr.bf16.mxu0 0
        %1206 = vmatpush1.bf16.msra.mxu0 %v1137
        %1207 = vmatprep.subr.bf16.mxu0 0
        %1208 = vmatpush1.bf16.msra.mxu0 %v1138
        %1209 = vmatprep.subr.bf16.mxu0 0
        %1210 = vmatpush1.bf16.msra.mxu0 %v1139
        %1211 = vmatprep.subr.bf16.mxu0 0
        %1212 = vmatpush1.bf16.msra.mxu0 %v1140
        %1213 = vmatprep.subr.bf16.mxu0 0
        %1214 = vmatpush1.bf16.msra.mxu0 %v1141
        %1215 = vmatprep.subr.bf16.mxu0 0
        %1216 = vmatpush1.bf16.msra.mxu0 %v1142
        %1217 = vmatprep.subr.bf16.mxu0 0
        %1218 = vmatpush1.bf16.msra.mxu0 %v1143
        %1219 = vmatprep.subr.bf16.mxu0 0
        %1220 = vmatpush1.bf16.msra.mxu0 %v1144
        %1221 = vmatprep.subr.bf16.mxu0 0
        %1222 = vmatpush1.bf16.msra.mxu0 %v1145
        %1223 = vmatprep.subr.bf16.mxu0 0
        %1224 = vmatpush1.bf16.msra.mxu0 %v1146
        %1225 = vmatprep.subr.bf16.mxu0 0
        %1226 = vmatpush1.bf16.msra.mxu0 %v1147
        %1227 = vmatprep.subr.bf16.mxu0 0
        %1228 = vmatpush1.bf16.msra.mxu0 %v1148
        %1229 = vmatprep.mubr.bf16.mxu0 %v931
        %1230 = vmatmul.mubr.bf16.gmra.mrb[0].mxu0 %v930
        %v1231 = vpop.f32.mrb[0].mxu0
        %v1232 = vadd.f32 %v1003, %v1231
        %v1233 = vpop.f32.mrb[0].mxu0
        %v1234 = vpop.f32.mrb[0].mxu0
        %v1235 = vadd.f32 %v1003, %v1234
        %v1236 = vpop.f32.mrb[0].mxu0
        %1237 = vdwg.mxu0
        %1238 = vmatprep.subr.bf16.mxu0 0
        %1239 = vmatpush1.bf16.msra.mxu0 %v1149
        %1240 = vmatprep.subr.bf16.mxu0 0
        %1241 = vmatpush1.bf16.msra.mxu0 %v1150
        %1242 = vmatprep.subr.bf16.mxu0 0
        %1243 = vmatpush1.bf16.msra.mxu0 %v1151
        %1244 = vmatprep.subr.bf16.mxu0 0
        %1245 = vmatpush1.bf16.msra.mxu0 %v1152
        %1246 = vmatprep.subr.bf16.mxu0 0
        %1247 = vmatpush1.bf16.msra.mxu0 %v1153
        %1248 = vmatprep.subr.bf16.mxu0 0
        %1249 = vmatpush1.bf16.msra.mxu0 %v1154
        %1250 = vmatprep.subr.bf16.mxu0 0
        %1251 = vmatpush1.bf16.msra.mxu0 %v1155
        %1252 = vmatprep.subr.bf16.mxu0 0
        %1253 = vmatpush1.bf16.msra.mxu0 %v1156
        %1254 = vmatprep.subr.bf16.mxu0 0
        %1255 = vmatpush1.bf16.msra.mxu0 %v1157
        %1256 = vmatprep.subr.bf16.mxu0 0
        %1257 = vmatpush1.bf16.msra.mxu0 %v1158
        %1258 = vmatprep.subr.bf16.mxu0 0
        %1259 = vmatpush1.bf16.msra.mxu0 %v1159
        %1260 = vmatprep.subr.bf16.mxu0 0
        %1261 = vmatpush1.bf16.msra.mxu0 %v1160
        %1262 = vmatprep.subr.bf16.mxu0 0
        %1263 = vmatpush1.bf16.msra.mxu0 %v1161
        %1264 = vmatprep.subr.bf16.mxu0 0
        %1265 = vmatpush1.bf16.msra.mxu0 %v1162
        %1266 = vmatprep.subr.bf16.mxu0 0
        %1267 = vmatpush1.bf16.msra.mxu0 %v1163
        %1268 = vmatprep.subr.bf16.mxu0 0
        %1269 = vmatpush1.bf16.msra.mxu0 %v1164
        %1270 = vmatprep.mubr.bf16.mxu0 %v933
        %1271 = vmatmul.mubr.bf16.gmra.mrb[0].mxu0 %v932
        %v1272 = vpop.f32.mrb[0].mxu0
        %v1273 = vadd.f32 %v1232, %v1272
        %v1274 = vpop.f32.mrb[0].mxu0
        %v1275 = vpop.f32.mrb[0].mxu0
        %v1276 = vadd.f32 %v1235, %v1275
        %v1277 = vpop.f32.mrb[0].mxu0
        %1278 = vdwg.mxu0
        %v1279 = vmul.f32 %v1273, 2.0
        %v1280 = vmul.f32 %v1276, 2.0
        %v1281 = vxor.u32 %v1279, 2147483648
        %v1282 = vxor.u32 %v1280, 2147483648
        %v1283 = vmul.f32 %v1281, 1.442695
        %v1284 = vpow.pop %v1283
        %v1285 = vmul.f32 %v1282, 1.442695
        %v1286 = vpow.pop %v1285
        %v1287 = vadd.f32 %v1284, 1.0
        %v1288 = vadd.f32 %v1286, 1.0
        %v1289 = vrcp.pop %v1287
        %v1290 = vmul.f32 1.0, %v1289
        %v1291 = vrcp.pop %v1288
        %v1292 = vmul.f32 1.0, %v1291
        %1293 = vst [vmem:[%s329] sm:$0xff] %v1290
        %1294 = vst [vmem:[%s329 + $0x8] sm:$0xff] %v1292
        %s1295 = sand.u32 %s185, 1
        %s1296 = sand.u32 %s185, 1
        %s1297 = smul.addr %s1296, 16
        %s1298 = scalar_lea.vmem [#allocation7], %s1297
        // Predicated region
        $region61: #{fc_mask_generator_forward.1} parent=47 // pred_check
          %p1299 = pneg %p195
        $region62: #{fc_mask_generator_forward.1} parent=47 // pred_check_branch
          %1301 = sbr.rel (%p1299) target = $region64
        $region63: #{fc_mask_generator_forward.1} parent=47 // pred_region
          %s1302 = smul.addr %s20, 8
          %s1303 = scalar_lea.vmem %s7, %s1302
          // Predicated region
          $region65: #{fc_mask_generator_forward.1} parent=63 // pred_check
            _
          $region66: #{fc_mask_generator_forward.1} parent=63 // pred_check_branch
            %1305 = sbr.rel (0) target = $region68
          $region67: #{fc_mask_generator_forward.1} parent=63 // pred_region
            // Predicated region
            $region69: #{fc_mask_generator_forward.1} parent=67 // pred_check
              _
            $region70: #{fc_mask_generator_forward.1} parent=67 // pred_check_branch
              %1307 = sbr.rel (0) target = $region72
            $region71: #{fc_mask_generator_forward.1} parent=67 // pred_region
              // Predicated region
              $region84: #{fc_mask_generator_forward.1} parent=71 // pred_check
                _
              $region85: #{fc_mask_generator_forward.1} parent=71 // pred_check_branch
                %1324 = sbr.rel (0) target = $region87
              $region86: #{fc_mask_generator_forward.1} parent=71 // pred_region
                loop: start=0, step=1, limit=1
                $region88: #{fc_mask_generator_forward.1} parent=86 // loop_pre_header
                  _
                $region89: #{fc_mask_generator_forward.1} parent=86 // loop_header
                  %s1326 = sphi 0, %s1330
                  %p1327 = scmp.ge.s32.totalorder %s1326, 1
                  %s1331 = sphi %s1298, %s1298
                  %s1332 = sphi %s1303, %s1303
                $region90: #{fc_mask_generator_forward.1} parent=86 // loop_header_branch
                  %1329 = sbr.rel (%p1327) target = $region94
                $region91: #{fc_mask_generator_forward.1} parent=86 // loop_body
                  %v1333 = vld [vmem:[%s1331] sm:$0xff]
                  %1334 = vst [vmem:[%s1332] sm:$0xff] %v1333
                  %v1335 = vld [vmem:[%s1331 + $0x8] sm:$0xff]
                  %1336 = vst [vmem:[%s1332 + $0x10] sm:$0xff] %v1335
                $region92: #{fc_mask_generator_forward.1} parent=86 // loop_footer
                  %s1330 = sadd.s32 1, %s1326
                $region93: #{fc_mask_generator_forward.1} parent=86 // loop_footer_branch
                  %1325 = sbr.rel target = $region89
                $region94: #{fc_mask_generator_forward.1} parent=86 // loop_exit
                  _
              $region87: #{fc_mask_generator_forward.1} parent=71 // pred_fallthru
                _
              // Predicated region
              $region95: #{fc_mask_generator_forward.1} parent=71 // pred_check
                _
              $region96: #{fc_mask_generator_forward.1} parent=71 // pred_check_branch
                %1338 = sbr.rel target = $region98
              $region97: #{fc_mask_generator_forward.1} parent=71 // pred_region
                _
              $region98: #{fc_mask_generator_forward.1} parent=71 // pred_fallthru
                _
            $region72: #{fc_mask_generator_forward.1} parent=67 // pred_fallthru
              _
            // Predicated region
            $region73: #{fc_mask_generator_forward.1} parent=67 // pred_check
              _
            $region74: #{fc_mask_generator_forward.1} parent=67 // pred_check_branch
              %1309 = sbr.rel target = $region76
            $region75: #{fc_mask_generator_forward.1} parent=67 // pred_region
              loop: start=0, step=1, limit=1
              $region77: #{fc_mask_generator_forward.1} parent=75 // loop_pre_header
                _
              $region78: #{fc_mask_generator_forward.1} parent=75 // loop_header
                %s1312 = sphi 0, %s1316
                %p1313 = scmp.ge.s32.totalorder %s1312, 1
                %s1317 = sphi %s1298, %s1298
                %s1318 = sphi %s1303, %s1303
              $region79: #{fc_mask_generator_forward.1} parent=75 // loop_header_branch
                %1315 = sbr.rel (%p1313) target = $region83
              $region80: #{fc_mask_generator_forward.1} parent=75 // loop_body
                %v1319 = vld [vmem:[%s1317] sm:$0xff]
                %1320 = vst [vmem:[%s1318] sm:$0xff] %v1319
                %v1321 = vld [vmem:[%s1317 + $0x8] sm:$0xff]
                %1322 = vst [vmem:[%s1318 + $0x10] sm:$0xff] %v1321
              $region81: #{fc_mask_generator_forward.1} parent=75 // loop_footer
                %s1316 = sadd.s32 1, %s1312
              $region82: #{fc_mask_generator_forward.1} parent=75 // loop_footer_branch
                %1311 = sbr.rel target = $region78
              $region83: #{fc_mask_generator_forward.1} parent=75 // loop_exit
                _
            $region76: #{fc_mask_generator_forward.1} parent=67 // pred_fallthru
              _
          $region68: #{fc_mask_generator_forward.1} parent=63 // pred_fallthru
            _
          %1339 = vnop
        $region64: #{fc_mask_generator_forward.1} parent=47 // pred_fallthru
          _
      $region48: #{fc_mask_generator_forward.1} parent=5 // pred_fallthru
        _
      %p1340 = scmp.le.s32.totalorder 2, %s15
      // Predicated region
      $region99: #{fc_mask_generator_forward.1} parent=5 // pred_check
        %p1341 = pneg %p1340
      $region100: #{fc_mask_generator_forward.1} parent=5 // pred_check_branch
        %1343 = sbr.rel (%p1341) target = $region102
      $region101: #{fc_mask_generator_forward.1} parent=5 // pred_region
        %s1344 = ssub.s32 %s15, 2
        // Predicated region
        $region103: #{fc_mask_generator_forward.1} parent=101 // pred_check
          %p1345 = pneg %p201
        $region104: #{fc_mask_generator_forward.1} parent=101 // pred_check_branch
          %1347 = sbr.rel (%p1345) target = $region106
        $region105: #{fc_mask_generator_forward.1} parent=101 // pred_region
          %s1348 = sand.u32 %s186, 1
          %s1349 = sand.u32 %s186, 1
          %s1350 = smul.addr %s1349, 16
          %s1351 = scalar_lea.vmem [#allocation7], %s1350
        $region106: #{fc_mask_generator_forward.1} parent=101 // pred_fallthru
          _
      $region102: #{fc_mask_generator_forward.1} parent=5 // pred_fallthru
        _
    $region6: #{fc_mask_generator_forward.1} parent=1 // loop_footer
      %s19 = sadd.s32 1, %s15
    $region7: #{fc_mask_generator_forward.1} parent=1 // loop_footer_branch
      %14 = sbr.rel target = $region3
    $region8: #{fc_mask_generator_forward.1} parent=1 // loop_exit
      _
    %1352 = vsyncpa [#allocation3], 1
    %s1353 = scalar_lea.sflag [#allocation3], 1
    %1354 = vsyncpa %s1353, 1
    %1355 = vsyncpa [#allocation5], 1

</llo_original>
